<compile_context>
chip_gen: v7x
topology: tpu7x:2x2x1
jax: 0.10.0
libtpu: 0.0.40
codegen_flags: <defaults>
</compile_context>

<pallas_src>
import jax
import jax.numpy as jnp
from jax.experimental import pallas as pl
from jax.experimental.pallas import tpu as pltpu

_DEFAULT_BATCH_TILE = 2048
_TILE_ALIGN = 256                      # MXU-friendly M alignment (v6e/v7x 256x256)
_VMEM_BUDGET = 12 * 1024 * 1024        # stay under v5e's 16 MiB scoped-VMEM default


def _round_up(x, m):
    return ((x + m - 1) // m) * m


def _cdiv(a, b):
    return -(-a // b)


def _step_vmem_bytes(tb, E, H, C):
    """Rough per-step VMEM working set (default 2x buffering everywhere)."""
    return (2 * tb * E * 4                                   # x tile (f32, streamed)
            + 2 * tb * C * 4                                 # out tile (f32, streamed)
            + 2 * (E * H * 2 + H * C * 2 + H * 4 + C * 4)    # resident weights/biases
            + tb * H * 4 + tb * H * 2)                       # hidden temp (f32 + bf16)


def mlp_head_kernel(x_ref, w1_ref, b1_ref, w2_ref, b2_ref, o_ref):
    # x_ref:  [TB, E]  (f32)   -> cast to bf16 in VMEM (no extra HBM pass)
    # w1_ref: [E, H]   (bf16)  b1_ref: [1, H]  (f32)
    # w2_ref: [H, C]   (bf16)  b2_ref: [1, C]  (f32)
    # o_ref:  [TB, C]  (f32)
    x = x_ref[...].astype(jnp.bfloat16)
    h = jnp.dot(x, w1_ref[...], preferred_element_type=jnp.float32)
    h = jnp.maximum(h + b1_ref[...], 0.0)            # f32 bias add + ReLU
    # Dropout(0.5): identity in eval/inference mode.
    h = h.astype(jnp.bfloat16)                        # bf16 for the second MXU pass
    out = jnp.dot(h, w2_ref[...], preferred_element_type=jnp.float32) + b2_ref[...]
    o_ref[...] = out.astype(o_ref.dtype)


def prepare_params(w1, b1, w2, b2):
    """One-time parameter prep (hoisted out of the per-call forward path).

    w1: [E, H], b1: [H], w2: [H, C], b2: [C]  (weights already [in, out]).
    """
    H = w1.shape[1]
    C = w2.shape[1]
    return (
        w1.astype(jnp.bfloat16),
        b1.astype(jnp.float32).reshape(1, H),
        w2.astype(jnp.bfloat16),
        b2.astype(jnp.float32).reshape(1, C),
    )


def model_head_forward(x, params, *, batch_tile=None, training=False):
    """Fused MLP head forward: Linear(E,256) -> ReLU -> Dropout(eval) -> Linear(256,C).

    x:      [B, E] float32
    params: prepare_params(w1, b1, w2, b2) output
    returns [B, C] float32
    """
    if training:
        # TODO(synk): training-mode Dropout(0.5) (pltpu.prng_seed + pltpu.stateful_bernoulli
        #             + 1/(1-p) scale) not implemented; eval-mode only.
        raise NotImplementedError("training-mode dropout is not implemented")

    w1_b, b1_2d, w2_b, b2_2d = params
    B, E = x.shape
    H = w1_b.shape[1]
    C = w2_b.shape[1]

    # ---- batch tile sizing -------------------------------------------------
    if batch_tile is None:
        batch_tile = _DEFAULT_BATCH_TILE
    # 256-aligned (MXU M dim / sublane friendly), never wastefully larger than B.
    batch_tile = max(_TILE_ALIGN, min(_round_up(batch_tile, _TILE_ALIGN),
                                      _round_up(B, _TILE_ALIGN)))
    # v7x megacore: keep >=2 grid steps once there is enough batch to split, so
    # the "parallel" axis can be sharded across both TensorCores.
    if B >= 2 * _TILE_ALIGN and batch_tile >= _round_up(B, _TILE_ALIGN):
        batch_tile = _round_up(_cdiv(B, 2), _TILE_ALIGN)
    # Keep the per-step working set under the tightest scoped-VMEM default (v5e).
    while batch_tile > _TILE_ALIGN and _step_vmem_bytes(batch_tile, E, H, C) > _VMEM_BUDGET:
        batch_tile -= _TILE_ALIGN

    grid = (_cdiv(B, batch_tile),)

    cost = pl.CostEstimate(
        flops=2 * B * E * H + 2 * B * H * C,
        transcendentals=0,
        bytes_accessed=B * E * 4 + E * H * 2 + H * 4 + H * C * 2 + C * 4 + B * C * 4,
    )

    # Note: last-dim block sizes (E, H, C) equal the full array dims, which is
    # legal even when they are not multiples of 128; the ragged last batch block
    # is handled by Pallas (padded reads, masked writes).
    return pl.pallas_call(
        mlp_head_kernel,
        out_shape=jax.ShapeDtypeStruct((B, C), jnp.float32),
        grid_spec=pltpu.PrefetchScalarGridSpec(
            num_scalar_prefetch=0,
            grid=grid,
            in_specs=[
                pl.BlockSpec((batch_tile, E), lambda i: (i, 0)),   # x tile (streamed)
                pl.BlockSpec((E, H), lambda i: (0, 0)),            # w1 (resident)
                pl.BlockSpec((1, H), lambda i: (0, 0)),            # b1 (resident)
                pl.BlockSpec((H, C), lambda i: (0, 0)),            # w2 (resident)
                pl.BlockSpec((1, C), lambda i: (0, 0)),            # b2 (resident)
            ],
            out_specs=pl.BlockSpec((batch_tile, C), lambda i: (i, 0)),
        ),
        compiler_params=pltpu.CompilerParams(
            dimension_semantics=("parallel",),
        ),
        cost_estimate=cost,
    )(x, w1_b, b1_2d, w2_b, b2_2d)


def init_params(key, embedding_dim, hidden_dim, num_classes):
    """Deterministic synthetic parameter init (PyTorch-like uniform fan-in bounds)."""
    k1, k2, k3, k4 = jax.random.split(key, 4)
    bound1 = 1.0 / jnp.sqrt(embedding_dim)
    bound2 = 1.0 / jnp.sqrt(hidden_dim)
    # Stored pre-transposed: [in, out].
    w1 = jax.random.uniform(k1, (embedding_dim, hidden_dim), jnp.float32, -bound1, bound1)
    b1 = jax.random.uniform(k2, (hidden_dim,), jnp.float32, -bound1, bound1)
    w2 = jax.random.uniform(k3, (hidden_dim, num_classes), jnp.float32, -bound2, bound2)
    b2 = jax.random.uniform(k4, (num_classes,), jnp.float32, -bound2, bound2)
    return w1, b1, w2, b2


if __name__ == "__main__":
    embedding_dim = 32
    hidden_dim = 256          # fixed by the module definition
    num_classes = 10
    batch = 16

    key = jax.random.PRNGKey(0)
    kx, kp = jax.random.split(key)
    x = jax.random.normal(kx, (batch, embedding_dim), jnp.float32)
    w1, b1, w2, b2 = init_params(kp, embedding_dim, hidden_dim, num_classes)

    params = prepare_params(w1, b1, w2, b2)   # one-time prep, hoisted out of forward
    out = model_head_forward(x, params)
    out = jax.block_until_ready(out)
    assert out.shape == (batch, num_classes)

    # Reference 1: bf16-matched reference (tight tolerance — same precision recipe).
    h_ref = jnp.maximum(
        jnp.dot(x.astype(jnp.bfloat16), w1.astype(jnp.bfloat16),
                preferred_element_type=jnp.float32) + b1, 0.0)
    ref_bf16 = jnp.dot(h_ref.astype(jnp.bfloat16), w2.astype(jnp.bfloat16),
                       preferred_element_type=jnp.float32) + b2
    assert jnp.allclose(out, ref_bf16, atol=1e-3, rtol=1e-3)

    # Reference 2: full f32 module semantics (loose tolerance — bf16 rounding).
    ref_f32 = jnp.maximum(x @ w1 + b1, 0.0) @ w2 + b2
    assert jnp.allclose(out, ref_f32, atol=5e-2, rtol=5e-2)

    print("KERNEL_OK")
</pallas_src>

<mosaic_0001>
module attributes {stable_mosaic.version = 11 : i64} {
  func.func @mlp_head_kernel(%arg0: i32, %arg1: memref<256x32xf32, #tpu.memory_space<vmem>>, %arg2: memref<32x256xbf16, #tpu.memory_space<vmem>>, %arg3: memref<1x256xf32, #tpu.memory_space<vmem>>, %arg4: memref<256x10xbf16, #tpu.memory_space<vmem>>, %arg5: memref<1x10xf32, #tpu.memory_space<vmem>>, %arg6: memref<256x10xf32, #tpu.memory_space<vmem>>) attributes {dimension_semantics = [#tpu.dimension_semantics<parallel>], iteration_bounds = array<i64: 1>, scalar_prefetch = 0 : i64, scratch_operands = 0 : i64, tpu.core_type = #tpu.core_type<tc>, window_params = [{transform_indices = @transform_0, window_bounds = array<i64: 256, 32>}, {pipeline_mode = #tpu.pipeline_mode<synchronous>, transform_indices = @transform_1, window_bounds = array<i64: 32, 256>}, {pipeline_mode = #tpu.pipeline_mode<synchronous>, transform_indices = @transform_2, window_bounds = array<i64: 1, 256>}, {pipeline_mode = #tpu.pipeline_mode<synchronous>, transform_indices = @transform_3, window_bounds = array<i64: 256, 10>}, {pipeline_mode = #tpu.pipeline_mode<synchronous>, transform_indices = @transform_4, window_bounds = array<i64: 1, 10>}, {transform_indices = @transform_5, window_bounds = array<i64: 256, 10>}]} {
    %c0 = arith.constant 0 : index
    %c0_0 = arith.constant 0 : index
    %0 = vector.load %arg1[%c0, %c0_0] : memref<256x32xf32, #tpu.memory_space<vmem>>, vector<256x32xf32>
    %1 = arith.truncf %0 : vector<256x32xf32> to vector<256x32xbf16>
    %c0_1 = arith.constant 0 : index
    %c0_2 = arith.constant 0 : index
    %2 = vector.load %arg2[%c0_1, %c0_2] : memref<32x256xbf16, #tpu.memory_space<vmem>>, vector<32x256xbf16>
    %cst = arith.constant dense<0.000000e+00> : vector<256x256xf32>
    %3 = tpu.matmul %1, %2, %cst {dimension_numbers = #tpu.dot_dimension_numbers<[1], [0], [0], [1], [0, 0, 1, 1], [], []>} : vector<256x32xbf16>, vector<32x256xbf16>, vector<256x256xf32> -> vector<256x256xf32>
    %c0_3 = arith.constant 0 : index
    %c0_4 = arith.constant 0 : index
    %4 = vector.load %arg3[%c0_3, %c0_4] : memref<1x256xf32, #tpu.memory_space<vmem>>, vector<1x256xf32>
    %5 = vector.broadcast %4 : vector<1x256xf32> to vector<256x256xf32>
    %6 = arith.addf %3, %5 : vector<256x256xf32>
    %cst_5 = arith.constant 0.000000e+00 : f32
    %7 = vector.broadcast %cst_5 : f32 to vector<256x256xf32>
    %8 = arith.maximumf %6, %7 : vector<256x256xf32>
    %9 = arith.truncf %8 : vector<256x256xf32> to vector<256x256xbf16>
    %c0_6 = arith.constant 0 : index
    %c0_7 = arith.constant 0 : index
    %10 = vector.load %arg4[%c0_6, %c0_7] : memref<256x10xbf16, #tpu.memory_space<vmem>>, vector<256x10xbf16>
    %cst_8 = arith.constant dense<0.000000e+00> : vector<256x10xf32>
    %11 = tpu.matmul %9, %10, %cst_8 {dimension_numbers = #tpu.dot_dimension_numbers<[1], [0], [0], [1], [0, 0, 1, 1], [], []>} : vector<256x256xbf16>, vector<256x10xbf16>, vector<256x10xf32> -> vector<256x10xf32>
    %c0_9 = arith.constant 0 : index
    %c0_10 = arith.constant 0 : index
    %12 = vector.load %arg5[%c0_9, %c0_10] : memref<1x10xf32, #tpu.memory_space<vmem>>, vector<1x10xf32>
    %13 = vector.broadcast %12 : vector<1x10xf32> to vector<256x10xf32>
    %14 = arith.addf %11, %13 : vector<256x10xf32>
    %c0_11 = arith.constant 0 : index
    %c0_12 = arith.constant 0 : index
    %15 = vector.load %arg6[%c0_11, %c0_12] : memref<256x10xf32, #tpu.memory_space<vmem>>, vector<256x10xf32>
    tpu.vector_store %arg6[%c0_11, %c0_12], %14 {strides = array<i32>} : memref<256x10xf32, #tpu.memory_space<vmem>>, vector<256x10xf32>,
    return
  }
  func.func @transform_0(%arg0: i32) -> (i32, i32) {
    %c0_i32 = arith.constant 0 : i32
    %c0_i32_0 = arith.constant 0 : i32
    return %arg0, %c0_i32 : i32, i32
  }
  func.func @transform_1(%arg0: i32) -> (i32, i32) {
    %c0_i32 = arith.constant 0 : i32
    %c0_i32_0 = arith.constant 0 : i32
    %c0_i32_1 = arith.constant 0 : i32
    return %c0_i32, %c0_i32_0 : i32, i32
  }
  func.func @transform_2(%arg0: i32) -> (i32, i32) {
    %c0_i32 = arith.constant 0 : i32
    %c0_i32_0 = arith.constant 0 : i32
    %c0_i32_1 = arith.constant 0 : i32
    return %c0_i32, %c0_i32_0 : i32, i32
  }
  func.func @transform_3(%arg0: i32) -> (i32, i32) {
    %c0_i32 = arith.constant 0 : i32
    %c0_i32_0 = arith.constant 0 : i32
    %c0_i32_1 = arith.constant 0 : i32
    return %c0_i32, %c0_i32_0 : i32, i32
  }
  func.func @transform_4(%arg0: i32) -> (i32, i32) {
    %c0_i32 = arith.constant 0 : i32
    %c0_i32_0 = arith.constant 0 : i32
    %c0_i32_1 = arith.constant 0 : i32
    return %c0_i32, %c0_i32_0 : i32, i32
  }
  func.func @transform_5(%arg0: i32) -> (i32, i32) {
    %c0_i32 = arith.constant 0 : i32
    %c0_i32_0 = arith.constant 0 : i32
    return %arg0, %c0_i32 : i32, i32
  }
}

</mosaic_0001>

<llo_original>
// kernel: tpu_custom_call.1
$region0: #{tpu_custom_call.1}
  #allocation0 [shape = 'u32[]', space=smem, size = 0x4, offset = 0x4, fixed_abs, tag = 'smem constant byte address 0x4 - core index']
  #allocation1 [shape = 'u32[144,128]{1,0:T(1,128)}', space=vmem, size = 0x12000, scoped, tag = 'internal scratch']
  %s0 = inlined_call_operand.vmem [shape: f32[16,32], index: 0, kind: input, shape index: {}]
  %s1 = inlined_call_operand.vmem [shape: bf16[32,256], index: 1, kind: input, shape index: {}]
  %s2 = inlined_call_operand.vmem [shape: f32[1,256], index: 2, kind: input, shape index: {}]
  %s3 = inlined_call_operand.vmem [shape: bf16[256,10], index: 3, kind: input, shape index: {}]
  %s4 = inlined_call_operand.vmem [shape: f32[1,10], index: 4, kind: input, shape index: {}]
  %s5 = inlined_call_operand.hbm [shape: f32[16,10], index: 5, kind: output, shape index: {}]
  %s6 = sld [smem:[#allocation0]]
  $region30: #{tpu_custom_call.1} parent=0
    _
  %s8 = ssub.s32 1, %s6
  %s9 = scalar_select 0, %s8, %s6
  $region1: #{tpu_custom_call.1} parent=0
    #allocation2 [shape = 'u8[131072]{0}', space=vmem, size = 0x20000, scoped, tag = 'output window, operand 0, single buffered']
    #allocation3 [shape = 's32[1]{0}', space=sflag, size = 0x4, scoped, tag = 'scoped memory for tpu_custom_call.1']
    %10 = vsyncpa [#allocation3], 0
    // Predicated region
    $region2: #{tpu_custom_call.1} parent=1 // pred_check
      _
    $region3: #{tpu_custom_call.1} parent=1 // pred_check_branch
      %12 = sbr.rel (0) target = $region5
    $region4: #{tpu_custom_call.1} parent=1 // pred_region
      _
    $region5: #{tpu_custom_call.1} parent=1 // pred_fallthru
      _
    // Predicated region
    $region6: #{tpu_custom_call.1} parent=1 // pred_check
      _
    $region7: #{tpu_custom_call.1} parent=1 // pred_check_branch
      %14 = sbr.rel (0) target = $region9
    $region8: #{tpu_custom_call.1} parent=1 // pred_region
      _
    $region9: #{tpu_custom_call.1} parent=1 // pred_fallthru
      _
    // Predicated region
    $region10: #{tpu_custom_call.1} parent=1 // pred_check
      _
    $region11: #{tpu_custom_call.1} parent=1 // pred_check_branch
      %16 = sbr.rel (0) target = $region13
    $region12: #{tpu_custom_call.1} parent=1 // pred_region
      _
    $region13: #{tpu_custom_call.1} parent=1 // pred_fallthru
      _
    // Predicated region
    $region14: #{tpu_custom_call.1} parent=1 // pred_check
      _
    $region15: #{tpu_custom_call.1} parent=1 // pred_check_branch
      %18 = sbr.rel (0) target = $region17
    $region16: #{tpu_custom_call.1} parent=1 // pred_region
      _
    $region17: #{tpu_custom_call.1} parent=1 // pred_fallthru
      _
    // Predicated region
    $region18: #{tpu_custom_call.1} parent=1 // pred_check
      _
    $region19: #{tpu_custom_call.1} parent=1 // pred_check_branch
      %20 = sbr.rel (0) target = $region21
    $region20: #{tpu_custom_call.1} parent=1 // pred_region
      _
    $region21: #{tpu_custom_call.1} parent=1 // pred_fallthru
      _
    %v22 = vld [vmem:[%s0] sm:$0xff]
    %v23 = vld [vmem:[%s0 + $0x8] sm:$0xff]
    %v24 = vld [vmem:[%s0 + $0x10] sm:$0xff]
    %v25 = vld [vmem:[%s0 + $0x18] sm:$0xff]
    %v26 = vld [vmem:[%s0 + $0x20] sm:$0xff]
    %v27 = vld [vmem:[%s0 + $0x28] sm:$0xff]
    %v28 = vld [vmem:[%s0 + $0x30] sm:$0xff]
    %v29 = vld [vmem:[%s0 + $0x38] sm:$0xff]
    %v30 = vld [vmem:[%s0 + $0x40] sm:$0xff]
    %v31 = vld [vmem:[%s0 + $0x48] sm:$0xff]
    %v32 = vld [vmem:[%s0 + $0x50] sm:$0xff]
    %v33 = vld [vmem:[%s0 + $0x58] sm:$0xff]
    %v34 = vld [vmem:[%s0 + $0x60] sm:$0xff]
    %v35 = vld [vmem:[%s0 + $0x68] sm:$0xff]
    %v36 = vld [vmem:[%s0 + $0x70] sm:$0xff]
    %v37 = vld [vmem:[%s0 + $0x78] sm:$0xff]
    %v38 = vld [vmem:[%s0 + $0x80] sm:$0xff]
    %v39 = vld [vmem:[%s0 + $0x88] sm:$0xff]
    %v40 = vld [vmem:[%s0 + $0x90] sm:$0xff]
    %v41 = vld [vmem:[%s0 + $0x98] sm:$0xff]
    %v42 = vld [vmem:[%s0 + $0xa0] sm:$0xff]
    %v43 = vld [vmem:[%s0 + $0xa8] sm:$0xff]
    %v44 = vld [vmem:[%s0 + $0xb0] sm:$0xff]
    %v45 = vld [vmem:[%s0 + $0xb8] sm:$0xff]
    %v46 = vld [vmem:[%s0 + $0xc0] sm:$0xff]
    %v47 = vld [vmem:[%s0 + $0xc8] sm:$0xff]
    %v48 = vld [vmem:[%s0 + $0xd0] sm:$0xff]
    %v49 = vld [vmem:[%s0 + $0xd8] sm:$0xff]
    %v50 = vld [vmem:[%s0 + $0xe0] sm:$0xff]
    %v51 = vld [vmem:[%s0 + $0xe8] sm:$0xff]
    %v52 = vld [vmem:[%s0 + $0xf0] sm:$0xff]
    %v53 = vld [vmem:[%s0 + $0xf8] sm:$0xff]
    %v54 = vpack.c.bf16 %v23, %v22
    %v55 = vpack.c.bf16 %v25, %v24
    %v56 = vpack.c.bf16 %v27, %v26
    %v57 = vpack.c.bf16 %v29, %v28
    %v58 = vpack.c.bf16 %v31, %v30
    %v59 = vpack.c.bf16 %v33, %v32
    %v60 = vpack.c.bf16 %v35, %v34
    %v61 = vpack.c.bf16 %v37, %v36
    %v62 = vpack.c.bf16 %v39, %v38
    %v63 = vpack.c.bf16 %v41, %v40
    %v64 = vpack.c.bf16 %v43, %v42
    %v65 = vpack.c.bf16 %v45, %v44
    %v66 = vpack.c.bf16 %v47, %v46
    %v67 = vpack.c.bf16 %v49, %v48
    %v68 = vpack.c.bf16 %v51, %v50
    %v69 = vpack.c.bf16 %v53, %v52
    %v70 = vld [vmem:[%s1] sm:$0xff]
    %v71 = vld [vmem:[%s1 + $0x8] sm:$0xff]
    %v72 = vld [vmem:[%s1 + $0x10] sm:$0xff]
    %v73 = vld [vmem:[%s1 + $0x18] sm:$0xff]
    %v74 = vld [vmem:[%s2] sm:$0x3]
    %v76 = vlaneseq
    %v77 = vshrl.u32 %v76, 7
    %v78 = vsub.s32 0, %v77
    %v79 = vrot.slane %v74, %v78
    %v80 = vlaneseq
    %v81 = vshrl.u32 %v80, 7
    %v82 = vsub.s32 1, %v81
    %v83 = vrot.slane %v74, %v82
    %v90 = vunpack.c.l.b16 %v70
    %v91 = vunpack.c.h.b16 %v70
    %v92 = vunpack.c.l.b16 %v71
    %v93 = vunpack.c.h.b16 %v71
    %v94 = vunpack.c.l.b16 %v72
    %v95 = vunpack.c.h.b16 %v72
    %v96 = vunpack.c.l.b16 %v73
    %v97 = vunpack.c.h.b16 %v73
    %v98 = vpack.c.b16 %v92, %v90
    %v99 = vpack.c.b16 %v93, %v91
    %v100 = vpack.c.b16 %v96, %v94
    %v101 = vpack.c.b16 %v97, %v95
    %vm106 = vcmask 261120
    %v108 = vsel %vm106, %v54, 0
    %v111 = vsel %vm106, %v55, 0
    %v114 = vsel %vm106, %v56, 0
    %v117 = vsel %vm106, %v57, 0
    %v120 = vsel %vm106, %v58, 0
    %v123 = vsel %vm106, %v59, 0
    %v126 = vsel %vm106, %v60, 0
    %v129 = vsel %vm106, %v61, 0
    %v132 = vsel %vm106, %v62, 0
    %v135 = vsel %vm106, %v63, 0
    %v138 = vsel %vm106, %v64, 0
    %v141 = vsel %vm106, %v65, 0
    %v144 = vsel %vm106, %v66, 0
    %v147 = vsel %vm106, %v67, 0
    %v150 = vsel %vm106, %v68, 0
    %v153 = vsel %vm106, %v69, 0
    %155 = vmatprep.subr.bf16.mxu0 %v99
    %156 = vmatpush1.bf16.msra.mxu0 %v98
    %157 = vmatprep.subr.bf16.mxu0 %v101
    %158 = vmatpush1.bf16.msra.mxu0 %v100
    %159 = vmatprep.subr.bf16.mxu0 0
    %160 = vmatpush1.bf16.msra.mxu0 0
    %161 = vmatprep.subr.bf16.mxu0 0
    %162 = vmatpush1.bf16.msra.mxu0 0
    %163 = vmatprep.subr.bf16.mxu0 0
    %164 = vmatpush1.bf16.msra.mxu0 0
    %165 = vmatprep.subr.bf16.mxu0 0
    %166 = vmatpush1.bf16.msra.mxu0 0
    %167 = vmatprep.subr.bf16.mxu0 0
    %168 = vmatpush1.bf16.msra.mxu0 0
    %169 = vmatprep.subr.bf16.mxu0 0
    %170 = vmatpush1.bf16.msra.mxu0 0
    %171 = vmatprep.subr.bf16.mxu0 0
    %172 = vmatpush1.bf16.msra.mxu0 0
    %173 = vmatprep.subr.bf16.mxu0 0
    %174 = vmatpush1.bf16.msra.mxu0 0
    %175 = vmatprep.subr.bf16.mxu0 0
    %176 = vmatpush1.bf16.msra.mxu0 0
    %177 = vmatprep.subr.bf16.mxu0 0
    %178 = vmatpush1.bf16.msra.mxu0 0
    %179 = vmatprep.subr.bf16.mxu0 0
    %180 = vmatpush1.bf16.msra.mxu0 0
    %181 = vmatprep.subr.bf16.mxu0 0
    %182 = vmatpush1.bf16.msra.mxu0 0
    %183 = vmatprep.subr.bf16.mxu0 0
    %184 = vmatpush1.bf16.msra.mxu0 0
    %185 = vmatprep.subr.bf16.mxu0 0
    %186 = vmatpush1.bf16.msra.mxu0 0
    %187 = vmatprep.mubr.bf16.mxu0 0
    %188 = vmatmul.mubr.bf16.gmra.mrb[0].mxu0 %v108
    %v189 = vpop.f32.mrb[0].mxu0
    %v190 = vadd.f32 %v79, %v189
    %v191 = vpop.f32.mrb[0].mxu0
    %v192 = vadd.f32 %v83, %v191
    %v193 = vpop.f32.mrb[0].mxu0
    %v194 = vadd.f32 %v79, %v193
    %v195 = vpop.f32.mrb[0].mxu0
    %v196 = vadd.f32 %v83, %v195
    %197 = vmatprep.mubr.bf16.mxu0 0
    %198 = vmatmul.mubr.bf16.gmra.mrb[0].mxu0 %v111
    %v199 = vpop.f32.mrb[0].mxu0
    %v200 = vadd.f32 %v79, %v199
    %v201 = vpop.f32.mrb[0].mxu0
    %v202 = vadd.f32 %v83, %v201
    %v203 = vpop.f32.mrb[0].mxu0
    %v204 = vadd.f32 %v79, %v203
    %v205 = vpop.f32.mrb[0].mxu0
    %v206 = vadd.f32 %v83, %v205
    %207 = vmatprep.mubr.bf16.mxu0 0
    %208 = vmatmul.mubr.bf16.gmra.mrb[0].mxu0 %v114
    %v209 = vpop.f32.mrb[0].mxu0
    %v210 = vadd.f32 %v79, %v209
    %v211 = vpop.f32.mrb[0].mxu0
    %v212 = vadd.f32 %v83, %v211
    %v213 = vpop.f32.mrb[0].mxu0
    %v214 = vadd.f32 %v79, %v213
    %v215 = vpop.f32.mrb[0].mxu0
    %v216 = vadd.f32 %v83, %v215
    %217 = vmatprep.mubr.bf16.mxu0 0
    %218 = vmatmul.mubr.bf16.gmra.mrb[0].mxu0 %v117
    %v219 = vpop.f32.mrb[0].mxu0
    %v220 = vadd.f32 %v79, %v219
    %v221 = vpop.f32.mrb[0].mxu0
    %v222 = vadd.f32 %v83, %v221
    %v223 = vpop.f32.mrb[0].mxu0
    %v224 = vadd.f32 %v79, %v223
    %v225 = vpop.f32.mrb[0].mxu0
    %v226 = vadd.f32 %v83, %v225
    %227 = vmatprep.mubr.bf16.mxu0 0
    %228 = vmatmul.mubr.bf16.gmra.mrb[0].mxu0 %v120
    %v229 = vpop.f32.mrb[0].mxu0
    %v230 = vadd.f32 %v79, %v229
    %v231 = vpop.f32.mrb[0].mxu0
    %v232 = vadd.f32 %v83, %v231
    %v233 = vpop.f32.mrb[0].mxu0
    %v234 = vadd.f32 %v79, %v233
    %v235 = vpop.f32.mrb[0].mxu0
    %v236 = vadd.f32 %v83, %v235
    %237 = vmatprep.mubr.bf16.mxu0 0
    %238 = vmatmul.mubr.bf16.gmra.mrb[0].mxu0 %v123
    %v239 = vpop.f32.mrb[0].mxu0
    %v240 = vadd.f32 %v79, %v239
    %v241 = vpop.f32.mrb[0].mxu0
    %v242 = vadd.f32 %v83, %v241
    %v243 = vpop.f32.mrb[0].mxu0
    %v244 = vadd.f32 %v79, %v243
    %v245 = vpop.f32.mrb[0].mxu0
    %v246 = vadd.f32 %v83, %v245
    %247 = vmatprep.mubr.bf16.mxu0 0
    %248 = vmatmul.mubr.bf16.gmra.mrb[0].mxu0 %v126
    %v249 = vpop.f32.mrb[0].mxu0
    %v250 = vadd.f32 %v79, %v249
    %v251 = vpop.f32.mrb[0].mxu0
    %v252 = vadd.f32 %v83, %v251
    %v253 = vpop.f32.mrb[0].mxu0
    %v254 = vadd.f32 %v79, %v253
    %v255 = vpop.f32.mrb[0].mxu0
    %v256 = vadd.f32 %v83, %v255
    %257 = vmatprep.mubr.bf16.mxu0 0
    %258 = vmatmul.mubr.bf16.gmra.mrb[0].mxu0 %v129
    %v259 = vpop.f32.mrb[0].mxu0
    %v260 = vadd.f32 %v79, %v259
    %v261 = vpop.f32.mrb[0].mxu0
    %v262 = vadd.f32 %v83, %v261
    %v263 = vpop.f32.mrb[0].mxu0
    %v264 = vadd.f32 %v79, %v263
    %v265 = vpop.f32.mrb[0].mxu0
    %v266 = vadd.f32 %v83, %v265
    %267 = vmatprep.mubr.bf16.mxu0 0
    %268 = vmatmul.mubr.bf16.gmra.mrb[0].mxu0 %v132
    %v269 = vpop.f32.mrb[0].mxu0
    %v270 = vadd.f32 %v79, %v269
    %v271 = vpop.f32.mrb[0].mxu0
    %v272 = vadd.f32 %v83, %v271
    %v273 = vpop.f32.mrb[0].mxu0
    %v274 = vadd.f32 %v79, %v273
    %v275 = vpop.f32.mrb[0].mxu0
    %v276 = vadd.f32 %v83, %v275
    %277 = vmatprep.mubr.bf16.mxu0 0
    %278 = vmatmul.mubr.bf16.gmra.mrb[0].mxu0 %v135
    %v279 = vpop.f32.mrb[0].mxu0
    %v280 = vadd.f32 %v79, %v279
    %v281 = vpop.f32.mrb[0].mxu0
    %v282 = vadd.f32 %v83, %v281
    %v283 = vpop.f32.mrb[0].mxu0
    %v284 = vadd.f32 %v79, %v283
    %v285 = vpop.f32.mrb[0].mxu0
    %v286 = vadd.f32 %v83, %v285
    %287 = vmatprep.mubr.bf16.mxu0 0
    %288 = vmatmul.mubr.bf16.gmra.mrb[0].mxu0 %v138
    %v289 = vpop.f32.mrb[0].mxu0
    %v290 = vadd.f32 %v79, %v289
    %v291 = vpop.f32.mrb[0].mxu0
    %v292 = vadd.f32 %v83, %v291
    %v293 = vpop.f32.mrb[0].mxu0
    %v294 = vadd.f32 %v79, %v293
    %v295 = vpop.f32.mrb[0].mxu0
    %v296 = vadd.f32 %v83, %v295
    %297 = vmatprep.mubr.bf16.mxu0 0
    %298 = vmatmul.mubr.bf16.gmra.mrb[0].mxu0 %v141
    %v299 = vpop.f32.mrb[0].mxu0
    %v300 = vadd.f32 %v79, %v299
    %v301 = vpop.f32.mrb[0].mxu0
    %v302 = vadd.f32 %v83, %v301
    %v303 = vpop.f32.mrb[0].mxu0
    %v304 = vadd.f32 %v79, %v303
    %v305 = vpop.f32.mrb[0].mxu0
    %v306 = vadd.f32 %v83, %v305
    %307 = vmatprep.mubr.bf16.mxu0 0
    %308 = vmatmul.mubr.bf16.gmra.mrb[0].mxu0 %v144
    %v309 = vpop.f32.mrb[0].mxu0
    %v310 = vadd.f32 %v79, %v309
    %v311 = vpop.f32.mrb[0].mxu0
    %v312 = vadd.f32 %v83, %v311
    %v313 = vpop.f32.mrb[0].mxu0
    %v314 = vadd.f32 %v79, %v313
    %v315 = vpop.f32.mrb[0].mxu0
    %v316 = vadd.f32 %v83, %v315
    %317 = vmatprep.mubr.bf16.mxu0 0
    %318 = vmatmul.mubr.bf16.gmra.mrb[0].mxu0 %v147
    %v319 = vpop.f32.mrb[0].mxu0
    %v320 = vadd.f32 %v79, %v319
    %v321 = vpop.f32.mrb[0].mxu0
    %v322 = vadd.f32 %v83, %v321
    %v323 = vpop.f32.mrb[0].mxu0
    %v324 = vadd.f32 %v79, %v323
    %v325 = vpop.f32.mrb[0].mxu0
    %v326 = vadd.f32 %v83, %v325
    %327 = vmatprep.mubr.bf16.mxu0 0
    %328 = vmatmul.mubr.bf16.gmra.mrb[0].mxu0 %v150
    %v329 = vpop.f32.mrb[0].mxu0
    %v330 = vadd.f32 %v79, %v329
    %v331 = vpop.f32.mrb[0].mxu0
    %v332 = vadd.f32 %v83, %v331
    %v333 = vpop.f32.mrb[0].mxu0
    %v334 = vadd.f32 %v79, %v333
    %v335 = vpop.f32.mrb[0].mxu0
    %v336 = vadd.f32 %v83, %v335
    %337 = vmatprep.mubr.bf16.mxu0 0
    %338 = vmatmul.mubr.bf16.gmra.mrb[0].mxu0 %v153
    %v339 = vpop.f32.mrb[0].mxu0
    %v340 = vadd.f32 %v79, %v339
    %v341 = vpop.f32.mrb[0].mxu0
    %v342 = vadd.f32 %v83, %v341
    %v343 = vpop.f32.mrb[0].mxu0
    %v344 = vadd.f32 %v79, %v343
    %v345 = vpop.f32.mrb[0].mxu0
    %v346 = vadd.f32 %v83, %v345
    %347 = vdwg.mxu0
    %v348 = vmax.f32 %v190, 0.0
    %v349 = vmax.f32 %v192, 0.0
    %v350 = vmax.f32 %v194, 0.0
    %v351 = vmax.f32 %v196, 0.0
    %v352 = vmax.f32 %v200, 0.0
    %v353 = vmax.f32 %v202, 0.0
    %v354 = vmax.f32 %v204, 0.0
    %v355 = vmax.f32 %v206, 0.0
    %v356 = vmax.f32 %v210, 0.0
    %v357 = vmax.f32 %v212, 0.0
    %v358 = vmax.f32 %v214, 0.0
    %v359 = vmax.f32 %v216, 0.0
    %v360 = vmax.f32 %v220, 0.0
    %v361 = vmax.f32 %v222, 0.0
    %v362 = vmax.f32 %v224, 0.0
    %v363 = vmax.f32 %v226, 0.0
    %v364 = vmax.f32 %v230, 0.0
    %v365 = vmax.f32 %v232, 0.0
    %v366 = vmax.f32 %v234, 0.0
    %v367 = vmax.f32 %v236, 0.0
    %v368 = vmax.f32 %v240, 0.0
    %v369 = vmax.f32 %v242, 0.0
    %v370 = vmax.f32 %v244, 0.0
    %v371 = vmax.f32 %v246, 0.0
    %v372 = vmax.f32 %v250, 0.0
    %v373 = vmax.f32 %v252, 0.0
    %v374 = vmax.f32 %v254, 0.0
    %v375 = vmax.f32 %v256, 0.0
    %v376 = vmax.f32 %v260, 0.0
    %v377 = vmax.f32 %v262, 0.0
    %v378 = vmax.f32 %v264, 0.0
    %v379 = vmax.f32 %v266, 0.0
    %v380 = vmax.f32 %v270, 0.0
    %v381 = vmax.f32 %v272, 0.0
    %v382 = vmax.f32 %v274, 0.0
    %v383 = vmax.f32 %v276, 0.0
    %v384 = vmax.f32 %v280, 0.0
    %v385 = vmax.f32 %v282, 0.0
    %v386 = vmax.f32 %v284, 0.0
    %v387 = vmax.f32 %v286, 0.0
    %v388 = vmax.f32 %v290, 0.0
    %v389 = vmax.f32 %v292, 0.0
    %v390 = vmax.f32 %v294, 0.0
    %v391 = vmax.f32 %v296, 0.0
    %v392 = vmax.f32 %v300, 0.0
    %v393 = vmax.f32 %v302, 0.0
    %v394 = vmax.f32 %v304, 0.0
    %v395 = vmax.f32 %v306, 0.0
    %v396 = vmax.f32 %v310, 0.0
    %v397 = vmax.f32 %v312, 0.0
    %v398 = vmax.f32 %v314, 0.0
    %v399 = vmax.f32 %v316, 0.0
    %v400 = vmax.f32 %v320, 0.0
    %v401 = vmax.f32 %v322, 0.0
    %v402 = vmax.f32 %v324, 0.0
    %v403 = vmax.f32 %v326, 0.0
    %v404 = vmax.f32 %v330, 0.0
    %v405 = vmax.f32 %v332, 0.0
    %v406 = vmax.f32 %v334, 0.0
    %v407 = vmax.f32 %v336, 0.0
    %v408 = vmax.f32 %v340, 0.0
    %v409 = vmax.f32 %v342, 0.0
    %v410 = vmax.f32 %v344, 0.0
    %v411 = vmax.f32 %v346, 0.0
    %v412 = vpack.c.bf16 %v350, %v348
    %v413 = vpack.c.bf16 %v351, %v349
    %v414 = vpack.c.bf16 %v354, %v352
    %v415 = vpack.c.bf16 %v355, %v353
    %v416 = vpack.c.bf16 %v358, %v356
    %v417 = vpack.c.bf16 %v359, %v357
    %v418 = vpack.c.bf16 %v362, %v360
    %v419 = vpack.c.bf16 %v363, %v361
    %v420 = vpack.c.bf16 %v366, %v364
    %v421 = vpack.c.bf16 %v367, %v365
    %v422 = vpack.c.bf16 %v370, %v368
    %v423 = vpack.c.bf16 %v371, %v369
    %v424 = vpack.c.bf16 %v374, %v372
    %v425 = vpack.c.bf16 %v375, %v373
    %v426 = vpack.c.bf16 %v378, %v376
    %v427 = vpack.c.bf16 %v379, %v377
    %v428 = vpack.c.bf16 %v382, %v380
    %v429 = vpack.c.bf16 %v383, %v381
    %v430 = vpack.c.bf16 %v386, %v384
    %v431 = vpack.c.bf16 %v387, %v385
    %v432 = vpack.c.bf16 %v390, %v388
    %v433 = vpack.c.bf16 %v391, %v389
    %v434 = vpack.c.bf16 %v394, %v392
    %v435 = vpack.c.bf16 %v395, %v393
    %v436 = vpack.c.bf16 %v398, %v396
    %v437 = vpack.c.bf16 %v399, %v397
    %v438 = vpack.c.bf16 %v402, %v400
    %v439 = vpack.c.bf16 %v403, %v401
    %v440 = vpack.c.bf16 %v406, %v404
    %v441 = vpack.c.bf16 %v407, %v405
    %v442 = vpack.c.bf16 %v410, %v408
    %v443 = vpack.c.bf16 %v411, %v409
    %v444 = vld [vmem:[%s3] sm:$0xf]
    %v445 = vld [vmem:[%s3 + $0x4] sm:$0xf]
    %v446 = vld [vmem:[%s3 + $0x8] sm:$0xf]
    %v447 = vld [vmem:[%s3 + $0xc] sm:$0xf]
    %v448 = vld [vmem:[%s3 + $0x10] sm:$0xf]
    %v449 = vld [vmem:[%s3 + $0x14] sm:$0xf]
    %v450 = vld [vmem:[%s3 + $0x18] sm:$0xf]
    %v451 = vld [vmem:[%s3 + $0x1c] sm:$0xf]
    %v452 = vld [vmem:[%s3 + $0x20] sm:$0xf]
    %v453 = vld [vmem:[%s3 + $0x24] sm:$0xf]
    %v454 = vld [vmem:[%s3 + $0x28] sm:$0xf]
    %v455 = vld [vmem:[%s3 + $0x2c] sm:$0xf]
    %v456 = vld [vmem:[%s3 + $0x30] sm:$0xf]
    %v457 = vld [vmem:[%s3 + $0x34] sm:$0xf]
    %v458 = vld [vmem:[%s3 + $0x38] sm:$0xf]
    %v459 = vld [vmem:[%s3 + $0x3c] sm:$0xf]
    %v460 = vld [vmem:[%s3 + $0x40] sm:$0xf]
    %v461 = vld [vmem:[%s3 + $0x44] sm:$0xf]
    %v462 = vld [vmem:[%s3 + $0x48] sm:$0xf]
    %v463 = vld [vmem:[%s3 + $0x4c] sm:$0xf]
    %v464 = vld [vmem:[%s3 + $0x50] sm:$0xf]
    %v465 = vld [vmem:[%s3 + $0x54] sm:$0xf]
    %v466 = vld [vmem:[%s3 + $0x58] sm:$0xf]
    %v467 = vld [vmem:[%s3 + $0x5c] sm:$0xf]
    %v468 = vld [vmem:[%s3 + $0x60] sm:$0xf]
    %v469 = vld [vmem:[%s3 + $0x64] sm:$0xf]
    %v470 = vld [vmem:[%s3 + $0x68] sm:$0xf]
    %v471 = vld [vmem:[%s3 + $0x6c] sm:$0xf]
    %v472 = vld [vmem:[%s3 + $0x70] sm:$0xf]
    %v473 = vld [vmem:[%s3 + $0x74] sm:$0xf]
    %v474 = vld [vmem:[%s3 + $0x78] sm:$0xf]
    %v475 = vld [vmem:[%s3 + $0x7c] sm:$0xf]
    %v476 = vld [vmem:[%s4] sm:$0x1]
    %v478 = vlaneseq
    %v479 = vshrl.u32 %v478, 7
    %v480 = vsub.s32 0, %v479
    %v481 = vrot.slane %v476, %v480
    %v515 = vunpack.c.l.b16 %v444
    %v516 = vunpack.c.l.b16 %v445
    %v517 = vunpack.c.l.b16 %v446
    %v518 = vunpack.c.l.b16 %v447
    %v519 = vunpack.c.l.b16 %v448
    %v520 = vunpack.c.l.b16 %v449
    %v521 = vunpack.c.l.b16 %v450
    %v522 = vunpack.c.l.b16 %v451
    %v523 = vunpack.c.l.b16 %v452
    %v524 = vunpack.c.l.b16 %v453
    %v525 = vunpack.c.l.b16 %v454
    %v526 = vunpack.c.l.b16 %v455
    %v527 = vunpack.c.l.b16 %v456
    %v528 = vunpack.c.l.b16 %v457
    %v529 = vunpack.c.l.b16 %v458
    %v530 = vunpack.c.l.b16 %v459
    %v531 = vunpack.c.l.b16 %v460
    %v532 = vunpack.c.l.b16 %v461
    %v533 = vunpack.c.l.b16 %v462
    %v534 = vunpack.c.l.b16 %v463
    %v535 = vunpack.c.l.b16 %v464
    %v536 = vunpack.c.l.b16 %v465
    %v537 = vunpack.c.l.b16 %v466
    %v538 = vunpack.c.l.b16 %v467
    %v539 = vunpack.c.l.b16 %v468
    %v540 = vunpack.c.l.b16 %v469
    %v541 = vunpack.c.l.b16 %v470
    %v542 = vunpack.c.l.b16 %v471
    %v543 = vunpack.c.l.b16 %v472
    %v544 = vunpack.c.l.b16 %v473
    %v545 = vunpack.c.l.b16 %v474
    %v546 = vunpack.c.l.b16 %v475
    %v547 = vpack.c.b16 %v516, %v515
    %v548 = vpack.c.b16 %v518, %v517
    %v549 = vpack.c.b16 %v520, %v519
    %v550 = vpack.c.b16 %v522, %v521
    %v551 = vpack.c.b16 %v524, %v523
    %v552 = vpack.c.b16 %v526, %v525
    %v553 = vpack.c.b16 %v528, %v527
    %v554 = vpack.c.b16 %v530, %v529
    %v555 = vpack.c.b16 %v532, %v531
    %v556 = vpack.c.b16 %v534, %v533
    %v557 = vpack.c.b16 %v536, %v535
    %v558 = vpack.c.b16 %v538, %v537
    %v559 = vpack.c.b16 %v540, %v539
    %v560 = vpack.c.b16 %v542, %v541
    %v561 = vpack.c.b16 %v544, %v543
    %v562 = vpack.c.b16 %v546, %v545
    %579 = vmatprep.subr.bf16.mxu0 0
    %580 = vmatpush1.bf16.msra.mxu0 %v547
    %581 = vmatprep.subr.bf16.mxu0 0
    %582 = vmatpush1.bf16.msra.mxu0 %v548
    %583 = vmatprep.subr.bf16.mxu0 0
    %584 = vmatpush1.bf16.msra.mxu0 %v549
    %585 = vmatprep.subr.bf16.mxu0 0
    %586 = vmatpush1.bf16.msra.mxu0 %v550
    %587 = vmatprep.subr.bf16.mxu0 0
    %588 = vmatpush1.bf16.msra.mxu0 %v551
    %589 = vmatprep.subr.bf16.mxu0 0
    %590 = vmatpush1.bf16.msra.mxu0 %v552
    %591 = vmatprep.subr.bf16.mxu0 0
    %592 = vmatpush1.bf16.msra.mxu0 %v553
    %593 = vmatprep.subr.bf16.mxu0 0
    %594 = vmatpush1.bf16.msra.mxu0 %v554
    %595 = vmatprep.subr.bf16.mxu0 0
    %596 = vmatpush1.bf16.msra.mxu0 %v555
    %597 = vmatprep.subr.bf16.mxu0 0
    %598 = vmatpush1.bf16.msra.mxu0 %v556
    %599 = vmatprep.subr.bf16.mxu0 0
    %600 = vmatpush1.bf16.msra.mxu0 %v557
    %601 = vmatprep.subr.bf16.mxu0 0
    %602 = vmatpush1.bf16.msra.mxu0 %v558
    %603 = vmatprep.subr.bf16.mxu0 0
    %604 = vmatpush1.bf16.msra.mxu0 %v559
    %605 = vmatprep.subr.bf16.mxu0 0
    %606 = vmatpush1.bf16.msra.mxu0 %v560
    %607 = vmatprep.subr.bf16.mxu0 0
    %608 = vmatpush1.bf16.msra.mxu0 %v561
    %609 = vmatprep.subr.bf16.mxu0 0
    %610 = vmatpush1.bf16.msra.mxu0 %v562
    %611 = vmatprep.mubr.bf16.mxu0 %v413
    %612 = vmatmul.mubr.bf16.gmra.mrb[0].mxu0 %v412
    %v613 = vpop.f32.mrb[0].mxu0
    %v614 = vadd.f32 %v481, %v613
    %v615 = vpop.f32.mrb[0].mxu0
    %v616 = vpop.f32.mrb[0].mxu0
    %v617 = vadd.f32 %v481, %v616
    %v618 = vpop.f32.mrb[0].mxu0
    %619 = vmatprep.mubr.bf16.mxu0 %v415
    %620 = vmatmul.mubr.bf16.gmra.mrb[0].mxu0 %v414
    %v621 = vpop.f32.mrb[0].mxu0
    %v622 = vadd.f32 %v481, %v621
    %v623 = vpop.f32.mrb[0].mxu0
    %v624 = vpop.f32.mrb[0].mxu0
    %v625 = vadd.f32 %v481, %v624
    %v626 = vpop.f32.mrb[0].mxu0
    %627 = vmatprep.mubr.bf16.mxu0 %v417
    %628 = vmatmul.mubr.bf16.gmra.mrb[0].mxu0 %v416
    %v629 = vpop.f32.mrb[0].mxu0
    %v630 = vadd.f32 %v481, %v629
    %v631 = vpop.f32.mrb[0].mxu0
    %v632 = vpop.f32.mrb[0].mxu0
    %v633 = vadd.f32 %v481, %v632
    %v634 = vpop.f32.mrb[0].mxu0
    %635 = vmatprep.mubr.bf16.mxu0 %v419
    %636 = vmatmul.mubr.bf16.gmra.mrb[0].mxu0 %v418
    %v637 = vpop.f32.mrb[0].mxu0
    %v638 = vadd.f32 %v481, %v637
    %v639 = vpop.f32.mrb[0].mxu0
    %v640 = vpop.f32.mrb[0].mxu0
    %v641 = vadd.f32 %v481, %v640
    %v642 = vpop.f32.mrb[0].mxu0
    %643 = vmatprep.mubr.bf16.mxu0 %v421
    %644 = vmatmul.mubr.bf16.gmra.mrb[0].mxu0 %v420
    %v645 = vpop.f32.mrb[0].mxu0
    %v646 = vadd.f32 %v481, %v645
    %v647 = vpop.f32.mrb[0].mxu0
    %v648 = vpop.f32.mrb[0].mxu0
    %v649 = vadd.f32 %v481, %v648
    %v650 = vpop.f32.mrb[0].mxu0
    %651 = vmatprep.mubr.bf16.mxu0 %v423
    %652 = vmatmul.mubr.bf16.gmra.mrb[0].mxu0 %v422
    %v653 = vpop.f32.mrb[0].mxu0
    %v654 = vadd.f32 %v481, %v653
    %v655 = vpop.f32.mrb[0].mxu0
    %v656 = vpop.f32.mrb[0].mxu0
    %v657 = vadd.f32 %v481, %v656
    %v658 = vpop.f32.mrb[0].mxu0
    %659 = vmatprep.mubr.bf16.mxu0 %v425
    %660 = vmatmul.mubr.bf16.gmra.mrb[0].mxu0 %v424
    %v661 = vpop.f32.mrb[0].mxu0
    %v662 = vadd.f32 %v481, %v661
    %v663 = vpop.f32.mrb[0].mxu0
    %v664 = vpop.f32.mrb[0].mxu0
    %v665 = vadd.f32 %v481, %v664
    %v666 = vpop.f32.mrb[0].mxu0
    %667 = vmatprep.mubr.bf16.mxu0 %v427
    %668 = vmatmul.mubr.bf16.gmra.mrb[0].mxu0 %v426
    %v669 = vpop.f32.mrb[0].mxu0
    %v670 = vadd.f32 %v481, %v669
    %v671 = vpop.f32.mrb[0].mxu0
    %v672 = vpop.f32.mrb[0].mxu0
    %v673 = vadd.f32 %v481, %v672
    %v674 = vpop.f32.mrb[0].mxu0
    %675 = vmatprep.mubr.bf16.mxu0 %v429
    %676 = vmatmul.mubr.bf16.gmra.mrb[0].mxu0 %v428
    %v677 = vpop.f32.mrb[0].mxu0
    %v678 = vadd.f32 %v481, %v677
    %v679 = vpop.f32.mrb[0].mxu0
    %v680 = vpop.f32.mrb[0].mxu0
    %v681 = vadd.f32 %v481, %v680
    %v682 = vpop.f32.mrb[0].mxu0
    %683 = vmatprep.mubr.bf16.mxu0 %v431
    %684 = vmatmul.mubr.bf16.gmra.mrb[0].mxu0 %v430
    %v685 = vpop.f32.mrb[0].mxu0
    %v686 = vadd.f32 %v481, %v685
    %v687 = vpop.f32.mrb[0].mxu0
    %v688 = vpop.f32.mrb[0].mxu0
    %v689 = vadd.f32 %v481, %v688
    %v690 = vpop.f32.mrb[0].mxu0
    %691 = vmatprep.mubr.bf16.mxu0 %v433
    %692 = vmatmul.mubr.bf16.gmra.mrb[0].mxu0 %v432
    %v693 = vpop.f32.mrb[0].mxu0
    %v694 = vadd.f32 %v481, %v693
    %v695 = vpop.f32.mrb[0].mxu0
    %v696 = vpop.f32.mrb[0].mxu0
    %v697 = vadd.f32 %v481, %v696
    %v698 = vpop.f32.mrb[0].mxu0
    %699 = vmatprep.mubr.bf16.mxu0 %v435
    %700 = vmatmul.mubr.bf16.gmra.mrb[0].mxu0 %v434
    %v701 = vpop.f32.mrb[0].mxu0
    %v702 = vadd.f32 %v481, %v701
    %v703 = vpop.f32.mrb[0].mxu0
    %v704 = vpop.f32.mrb[0].mxu0
    %v705 = vadd.f32 %v481, %v704
    %v706 = vpop.f32.mrb[0].mxu0
    %707 = vmatprep.mubr.bf16.mxu0 %v437
    %708 = vmatmul.mubr.bf16.gmra.mrb[0].mxu0 %v436
    %v709 = vpop.f32.mrb[0].mxu0
    %v710 = vadd.f32 %v481, %v709
    %v711 = vpop.f32.mrb[0].mxu0
    %v712 = vpop.f32.mrb[0].mxu0
    %v713 = vadd.f32 %v481, %v712
    %v714 = vpop.f32.mrb[0].mxu0
    %715 = vmatprep.mubr.bf16.mxu0 %v439
    %716 = vmatmul.mubr.bf16.gmra.mrb[0].mxu0 %v438
    %v717 = vpop.f32.mrb[0].mxu0
    %v718 = vadd.f32 %v481, %v717
    %v719 = vpop.f32.mrb[0].mxu0
    %v720 = vpop.f32.mrb[0].mxu0
    %v721 = vadd.f32 %v481, %v720
    %v722 = vpop.f32.mrb[0].mxu0
    %723 = vmatprep.mubr.bf16.mxu0 %v441
    %724 = vmatmul.mubr.bf16.gmra.mrb[0].mxu0 %v440
    %v725 = vpop.f32.mrb[0].mxu0
    %v726 = vadd.f32 %v481, %v725
    %v727 = vpop.f32.mrb[0].mxu0
    %v728 = vpop.f32.mrb[0].mxu0
    %v729 = vadd.f32 %v481, %v728
    %v730 = vpop.f32.mrb[0].mxu0
    %731 = vmatprep.mubr.bf16.mxu0 %v443
    %732 = vmatmul.mubr.bf16.gmra.mrb[0].mxu0 %v442
    %v733 = vpop.f32.mrb[0].mxu0
    %v734 = vadd.f32 %v481, %v733
    %v735 = vpop.f32.mrb[0].mxu0
    %v736 = vpop.f32.mrb[0].mxu0
    %v737 = vadd.f32 %v481, %v736
    %v738 = vpop.f32.mrb[0].mxu0
    %739 = vdwg.mxu0
    %vm740 = vcmask 80896
    %741 = vst.msk [vmem:[#allocation2] sm:$0xff] %vm740, %v614
    %742 = vst.msk [vmem:[#allocation2 + $0x8] sm:$0xff] %vm740, %v617
    %743 = vst.msk [vmem:[#allocation2 + $0x10] sm:$0xff] %vm740, %v622
    %744 = vst.msk [vmem:[#allocation2 + $0x18] sm:$0xff] %vm740, %v625
    %745 = vst.msk [vmem:[#allocation2 + $0x20] sm:$0xff] %vm740, %v630
    %746 = vst.msk [vmem:[#allocation2 + $0x28] sm:$0xff] %vm740, %v633
    %747 = vst.msk [vmem:[#allocation2 + $0x30] sm:$0xff] %vm740, %v638
    %748 = vst.msk [vmem:[#allocation2 + $0x38] sm:$0xff] %vm740, %v641
    %749 = vst.msk [vmem:[#allocation2 + $0x40] sm:$0xff] %vm740, %v646
    %750 = vst.msk [vmem:[#allocation2 + $0x48] sm:$0xff] %vm740, %v649
    %751 = vst.msk [vmem:[#allocation2 + $0x50] sm:$0xff] %vm740, %v654
    %752 = vst.msk [vmem:[#allocation2 + $0x58] sm:$0xff] %vm740, %v657
    %753 = vst.msk [vmem:[#allocation2 + $0x60] sm:$0xff] %vm740, %v662
    %754 = vst.msk [vmem:[#allocation2 + $0x68] sm:$0xff] %vm740, %v665
    %755 = vst.msk [vmem:[#allocation2 + $0x70] sm:$0xff] %vm740, %v670
    %756 = vst.msk [vmem:[#allocation2 + $0x78] sm:$0xff] %vm740, %v673
    %757 = vst.msk [vmem:[#allocation2 + $0x80] sm:$0xff] %vm740, %v678
    %758 = vst.msk [vmem:[#allocation2 + $0x88] sm:$0xff] %vm740, %v681
    %759 = vst.msk [vmem:[#allocation2 + $0x90] sm:$0xff] %vm740, %v686
    %760 = vst.msk [vmem:[#allocation2 + $0x98] sm:$0xff] %vm740, %v689
    %761 = vst.msk [vmem:[#allocation2 + $0xa0] sm:$0xff] %vm740, %v694
    %762 = vst.msk [vmem:[#allocation2 + $0xa8] sm:$0xff] %vm740, %v697
    %763 = vst.msk [vmem:[#allocation2 + $0xb0] sm:$0xff] %vm740, %v702
    %764 = vst.msk [vmem:[#allocation2 + $0xb8] sm:$0xff] %vm740, %v705
    %765 = vst.msk [vmem:[#allocation2 + $0xc0] sm:$0xff] %vm740, %v710
    %766 = vst.msk [vmem:[#allocation2 + $0xc8] sm:$0xff] %vm740, %v713
    %767 = vst.msk [vmem:[#allocation2 + $0xd0] sm:$0xff] %vm740, %v718
    %768 = vst.msk [vmem:[#allocation2 + $0xd8] sm:$0xff] %vm740, %v721
    %769 = vst.msk [vmem:[#allocation2 + $0xe0] sm:$0xff] %vm740, %v726
    %770 = vst.msk [vmem:[#allocation2 + $0xe8] sm:$0xff] %vm740, %v729
    %771 = vst.msk [vmem:[#allocation2 + $0xf0] sm:$0xff] %vm740, %v734
    %772 = vst.msk [vmem:[#allocation2 + $0xf8] sm:$0xff] %vm740, %v737
    // Predicated region
    $region22: #{tpu_custom_call.1} parent=1 // pred_check
      _
    $region23: #{tpu_custom_call.1} parent=1 // pred_check_branch
      %774 = sbr.rel (0) target = $region25
    $region24: #{tpu_custom_call.1} parent=1 // pred_region
      %s776 = ssub.s32 4096, 256
      %777 = vsyncadd [#allocation3], %s776
      %s778 = sshll.u32 [#allocation2], 4
      %s779 = int_to_ptr.vmem [resolvable:$true] %s778
      %784 = dma.vmem_to_hbm [thread:$0]  %s779, 256, %s5, [#allocation3], 128, 128, 8
    $region25: #{tpu_custom_call.1} parent=1 // pred_fallthru
      _
    // Predicated region
    $region26: #{tpu_custom_call.1} parent=1 // pred_check
      _
    $region27: #{tpu_custom_call.1} parent=1 // pred_check_branch
      %786 = sbr.rel (0) target = $region29
    $region28: #{tpu_custom_call.1} parent=1 // pred_region
      %787 = dma.done [#allocation3], 4096
    $region29: #{tpu_custom_call.1} parent=1 // pred_fallthru
      _
    %788 = vsyncpa [#allocation3], 1

</llo_original>
